<compile_context>
chip_gen: v7x
topology: tpu7x:2x2x1
jax: 0.10.0
libtpu: 0.0.40
codegen_flags: <defaults>
</compile_context>

<pallas_src>
import functools

import jax
import jax.numpy as jnp
from jax.experimental import pallas as pl
from jax.experimental.pallas import tpu as pltpu

LN_EPS = 1e-12  # BERT-style LayerNorm eps


# ---------------------------------------------------------------------------
# Kernel body
# ---------------------------------------------------------------------------
def _pos_ln_kernel(emb_ref, pos_ref, gamma_ref, beta_ref, out_ref, *, hidden):
    # emb_ref:            (Bb, T, H)  slab of batch rows for this grid step
    # pos_ref:            (1,  T, H)  shared position embeddings (constant
    #                                 index map -> stays VMEM-resident)
    # gamma_ref/beta_ref: (1, 1, H)   LayerNorm affine params (pre-shaped)
    x = emb_ref[...].astype(jnp.float32) + pos_ref[...].astype(jnp.float32)

    inv_h = 1.0 / float(hidden)
    mean = jnp.sum(x, axis=-1, keepdims=True) * inv_h
    xc = x - mean                                   # centered (torch-style)
    var = jnp.sum(xc * xc, axis=-1, keepdims=True) * inv_h
    inv = jax.lax.rsqrt(var + LN_EPS)

    gamma = gamma_ref[...].astype(jnp.float32)      # (1, 1, H) broadcasts
    beta = beta_ref[...].astype(jnp.float32)
    out_ref[...] = (xc * inv * gamma + beta).astype(out_ref.dtype)
    # TODO(synk): dropout(p=0.1) is identity in eval mode; training-mode RNG
    # dropout intentionally omitted.
    # TODO(synk): for H not a multiple of 128 (toy shapes), the output stores
    # are masked vst.msk; a lane-dense (T*H) flattening with a block-diagonal
    # ones matmul for the per-H reductions would fix it, kept out for clarity.


# ---------------------------------------------------------------------------
# Generation-aware configuration
# ---------------------------------------------------------------------------
def _hw_config():
    """Return (vmem_limit_bytes, num_tensorcores_per_chip), with safe fallbacks."""
    kind = ""
    try:
        kind = jax.devices()[0].device_kind.lower()
    except Exception:
        pass
    vmem_phys = None
    try:
        info = pltpu.get_tpu_info()
        vmem_phys = getattr(info, "vmem_capacity_bytes", None)
    except Exception:
        pass

    is_2tc = ("v7" in kind) or ("7x" in kind)
    if vmem_phys is None:
        vmem_phys = (64 << 20) if is_2tc else (128 << 20)

    if is_2tc or vmem_phys <= (64 << 20):
        # v7x-like: 64 MiB physical VMEM per TensorCore -> stay well under it.
        vmem_limit = 48 << 20
        num_tc = 2 if is_2tc else 1
    else:
        # v5e / v6e: 128 MiB physical VMEM, single TensorCore -> big blocks.
        vmem_limit = 64 << 20
        num_tc = 1
    return vmem_limit, num_tc


def _choose_batch_block(batch, per_row_bytes, budget_bytes, num_tc):
    """Rows per grid step.

    - As many rows as the (f32-temp-aware) VMEM budget allows, to amortize the
      ~0.35 us per-step pipeline overhead (this kernel is purely HBM-bound).
    - On 2-TensorCore parts only: keep >= 2 (ideally >= 4, even-count, evenly
      sized) grid steps so both cores get balanced work.
    - Always a divisor of `batch` so no padded tail block is processed.
    """
    bb = max(1, min(batch, budget_bytes // max(1, per_row_bytes)))

    if num_tc >= 2 and batch >= 2:
        min_steps = min(batch, 2 * num_tc)          # aim for 4 steps if possible
        bb = min(bb, max(1, batch // min_steps))

    # Round down to a divisor of batch (no wasted tail DMA/compute/writeback).
    while batch % bb != 0:
        bb -= 1

    if num_tc >= 2 and batch >= 2 and bb > 1:
        # Prefer an even number of evenly sized steps for 2-core balance.
        if (batch // bb) % 2 != 0:
            b2 = bb - 1
            while b2 >= 1 and (batch % b2 != 0 or (batch // b2) % 2 != 0):
                b2 -= 1
            if b2 >= 1:
                bb = b2
    return bb


# ---------------------------------------------------------------------------
# Wrapper
# ---------------------------------------------------------------------------
def position_embedding_for_video(embeddings, pos_table, gamma, beta, maxframe):
    """embeddings: (B, T, H) with T == maxframe; pos_table: (16, H)."""
    B, T, H = embeddings.shape
    assert T == maxframe
    dtype = embeddings.dtype
    itemsize = jnp.dtype(dtype).itemsize

    # Static "embedding lookup" for position_ids = arange(maxframe).
    pos_emb = pos_table[:maxframe].reshape(1, T, H)

    # Sublane density: a packed vreg holds 32//itemsize sublanes (8 f32,
    # 16 bf16).  If T under-fills that, group `g` consecutive batch rows via a
    # free contiguous reshape and tile the position slab g times — identical
    # per-row semantics (LayerNorm is per (b, t) row over H).
    sub = max(1, 32 // itemsize)
    group = 1
    if T % sub != 0:
        for g in (2, 4, 8, 16):
            if B % g == 0 and (T * g) % sub == 0:
                group = g
                break
    if group > 1:
        Bg, Tg = B // group, T * group
        emb_in = embeddings.reshape(Bg, Tg, H)
        pos_in = jnp.tile(pos_emb, (1, group, 1))
    else:
        Bg, Tg = B, T
        emb_in = embeddings
        pos_in = pos_emb

    gamma3d = gamma.reshape(1, 1, H)
    beta3d = beta.reshape(1, 1, H)

    vmem_limit, num_tc = _hw_config()

    # Per-row VMEM footprint of a block: double-buffered input + output slabs
    # at the input dtype, plus ~3 block-sized f32 temporaries in the body.
    row_elems = Tg * H
    per_row = 4 * row_elems * itemsize + 3 * row_elems * 4
    resident = (2 * pos_in.size * jnp.dtype(pos_in.dtype).itemsize
                + 4 * H * 4 * 2)                     # pos (dbl-buf) + gamma/beta
    budget = max(per_row, int(vmem_limit * 0.8) - resident)

    bb = _choose_batch_block(Bg, per_row, budget, num_tc)
    grid = (Bg // bb,)

    kernel = functools.partial(_pos_ln_kernel, hidden=H)
    out = pl.pallas_call(
        kernel,
        out_shape=jax.ShapeDtypeStruct((Bg, Tg, H), dtype),
        grid_spec=pltpu.PrefetchScalarGridSpec(
            num_scalar_prefetch=0,
            grid=grid,
            in_specs=[
                pl.BlockSpec((bb, Tg, H), lambda b: (b, 0, 0)),
                pl.BlockSpec((1, Tg, H), lambda b: (0, 0, 0)),
                pl.BlockSpec((1, 1, H), lambda b: (0, 0, 0)),
                pl.BlockSpec((1, 1, H), lambda b: (0, 0, 0)),
            ],
            out_specs=pl.BlockSpec((bb, Tg, H), lambda b: (b, 0, 0)),
        ),
        compiler_params=pltpu.CompilerParams(
            dimension_semantics=("parallel",),
            vmem_limit_bytes=vmem_limit,
        ),
    )(emb_in, pos_in, gamma3d, beta3d)

    if group > 1:
        out = out.reshape(B, T, H)
    return out


# ---------------------------------------------------------------------------
# Pure-JAX reference
# ---------------------------------------------------------------------------
def reference(embeddings, pos_table, gamma, beta, maxframe):
    pos_emb = pos_table[:maxframe][None, :, :]
    x = embeddings.astype(jnp.float32) + pos_emb.astype(jnp.float32)
    mean = jnp.mean(x, axis=-1, keepdims=True)
    var = jnp.mean((x - mean) ** 2, axis=-1, keepdims=True)
    xn = (x - mean) / jnp.sqrt(var + LN_EPS)
    return (xn * gamma + beta).astype(embeddings.dtype)


if __name__ == "__main__":
    key = jax.random.PRNGKey(0)
    B, maxframe, H = 2, 8, 32
    k1, k2, k3, k4 = jax.random.split(key, 4)

    # Deterministic synthetic parameters (module __init__ shapes):
    #   position_embeddings: nn.Embedding(16, H)  -> table (16, H)
    #   LayerNorm: weight (H,), bias (H,)
    pos_table = jax.random.normal(k1, (16, H), dtype=jnp.float32) * 0.02
    gamma = 1.0 + 0.1 * jax.random.normal(k2, (H,), dtype=jnp.float32)
    beta = 0.1 * jax.random.normal(k3, (H,), dtype=jnp.float32)

    embeddings = jax.random.normal(k4, (B, maxframe, H), dtype=jnp.float32)

    out = position_embedding_for_video(embeddings, pos_table, gamma, beta, maxframe)
    out = jax.block_until_ready(out)

    ref = reference(embeddings, pos_table, gamma, beta, maxframe)
    assert out.shape == (B, maxframe, H)
    assert jnp.allclose(out, ref, atol=1e-5, rtol=1e-5), "mismatch vs reference"

    print("KERNEL_OK")
</pallas_src>

<mosaic_0001>
module attributes {stable_mosaic.version = 11 : i64} {
  func.func @_pos_ln_kernel(%arg0: i32, %arg1: memref<2x8x32xf32, #tpu.memory_space<vmem>>, %arg2: memref<1x8x32xf32, #tpu.memory_space<vmem>>, %arg3: memref<1x1x32xf32, #tpu.memory_space<vmem>>, %arg4: memref<1x1x32xf32, #tpu.memory_space<vmem>>, %arg5: memref<2x8x32xf32, #tpu.memory_space<vmem>>) attributes {dimension_semantics = [#tpu.dimension_semantics<parallel>], iteration_bounds = array<i64: 1>, scalar_prefetch = 0 : i64, scratch_operands = 0 : i64, tpu.core_type = #tpu.core_type<tc>, window_params = [{transform_indices = @transform_0, window_bounds = array<i64: 2, 8, 32>}, {pipeline_mode = #tpu.pipeline_mode<synchronous>, transform_indices = @transform_1, window_bounds = array<i64: 1, 8, 32>}, {pipeline_mode = #tpu.pipeline_mode<synchronous>, transform_indices = @transform_2, window_bounds = array<i64: 1, 1, 32>}, {pipeline_mode = #tpu.pipeline_mode<synchronous>, transform_indices = @transform_3, window_bounds = array<i64: 1, 1, 32>}, {transform_indices = @transform_4, window_bounds = array<i64: 2, 8, 32>}]} {
    %c0 = arith.constant 0 : index
    %c0_0 = arith.constant 0 : index
    %c0_1 = arith.constant 0 : index
    %0 = vector.load %arg1[%c0, %c0_0, %c0_1] : memref<2x8x32xf32, #tpu.memory_space<vmem>>, vector<2x8x32xf32>
    %c0_2 = arith.constant 0 : index
    %c0_3 = arith.constant 0 : index
    %c0_4 = arith.constant 0 : index
    %1 = vector.load %arg2[%c0_2, %c0_3, %c0_4] : memref<1x8x32xf32, #tpu.memory_space<vmem>>, vector<1x8x32xf32>
    %2 = vector.broadcast %1 : vector<1x8x32xf32> to vector<2x8x32xf32>
    %3 = arith.addf %0, %2 : vector<2x8x32xf32>
    %cst = arith.constant dense<0.000000e+00> : vector<2x8xf32>
    %4 = vector.multi_reduction <add>, %3, %cst [2] : vector<2x8x32xf32> to vector<2x8xf32>
    %5 = vector.shape_cast %4 : vector<2x8xf32> to vector<2x8x1xf32>
    %cst_5 = arith.constant 3.125000e-02 : f32
    %6 = vector.broadcast %cst_5 : f32 to vector<2x8x1xf32>
    %7 = arith.mulf %5, %6 : vector<2x8x1xf32>
    %8 = vector.broadcast %7 : vector<2x8x1xf32> to vector<2x8x32xf32>
    %9 = arith.subf %3, %8 : vector<2x8x32xf32>
    %10 = arith.mulf %9, %9 : vector<2x8x32xf32>
    %cst_6 = arith.constant dense<0.000000e+00> : vector<2x8xf32>
    %11 = vector.multi_reduction <add>, %10, %cst_6 [2] : vector<2x8x32xf32> to vector<2x8xf32>
    %12 = vector.shape_cast %11 : vector<2x8xf32> to vector<2x8x1xf32>
    %cst_7 = arith.constant 3.125000e-02 : f32
    %13 = vector.broadcast %cst_7 : f32 to vector<2x8x1xf32>
    %14 = arith.mulf %12, %13 : vector<2x8x1xf32>
    %cst_8 = arith.constant 9.99999996E-13 : f32
    %15 = vector.broadcast %cst_8 : f32 to vector<2x8x1xf32>
    %16 = arith.addf %14, %15 : vector<2x8x1xf32>
    %17 = math.rsqrt %16 : vector<2x8x1xf32>
    %c0_9 = arith.constant 0 : index
    %c0_10 = arith.constant 0 : index
    %c0_11 = arith.constant 0 : index
    %18 = vector.load %arg3[%c0_9, %c0_10, %c0_11] : memref<1x1x32xf32, #tpu.memory_space<vmem>>, vector<1x1x32xf32>
    %c0_12 = arith.constant 0 : index
    %c0_13 = arith.constant 0 : index
    %c0_14 = arith.constant 0 : index
    %19 = vector.load %arg4[%c0_12, %c0_13, %c0_14] : memref<1x1x32xf32, #tpu.memory_space<vmem>>, vector<1x1x32xf32>
    %20 = vector.broadcast %17 : vector<2x8x1xf32> to vector<2x8x32xf32>
    %21 = arith.mulf %9, %20 : vector<2x8x32xf32>
    %22 = vector.broadcast %18 : vector<1x1x32xf32> to vector<2x8x32xf32>
    %23 = arith.mulf %21, %22 : vector<2x8x32xf32>
    %24 = vector.broadcast %19 : vector<1x1x32xf32> to vector<2x8x32xf32>
    %25 = arith.addf %23, %24 : vector<2x8x32xf32>
    %c0_15 = arith.constant 0 : index
    %c0_16 = arith.constant 0 : index
    %c0_17 = arith.constant 0 : index
    %26 = vector.load %arg5[%c0_15, %c0_16, %c0_17] : memref<2x8x32xf32, #tpu.memory_space<vmem>>, vector<2x8x32xf32>
    tpu.vector_store %arg5[%c0_15, %c0_16, %c0_17], %25 {strides = array<i32>} : memref<2x8x32xf32, #tpu.memory_space<vmem>>, vector<2x8x32xf32>,
    return
  }
  func.func @transform_0(%arg0: i32) -> (i32, i32, i32) {
    %c0_i32 = arith.constant 0 : i32
    %c0_i32_0 = arith.constant 0 : i32
    %c0_i32_1 = arith.constant 0 : i32
    return %arg0, %c0_i32, %c0_i32_0 : i32, i32, i32
  }
  func.func @transform_1(%arg0: i32) -> (i32, i32, i32) {
    %c0_i32 = arith.constant 0 : i32
    %c0_i32_0 = arith.constant 0 : i32
    %c0_i32_1 = arith.constant 0 : i32
    %c0_i32_2 = arith.constant 0 : i32
    return %c0_i32, %c0_i32_0, %c0_i32_1 : i32, i32, i32
  }
  func.func @transform_2(%arg0: i32) -> (i32, i32, i32) {
    %c0_i32 = arith.constant 0 : i32
    %c0_i32_0 = arith.constant 0 : i32
    %c0_i32_1 = arith.constant 0 : i32
    %c0_i32_2 = arith.constant 0 : i32
    return %c0_i32, %c0_i32_0, %c0_i32_1 : i32, i32, i32
  }
  func.func @transform_3(%arg0: i32) -> (i32, i32, i32) {
    %c0_i32 = arith.constant 0 : i32
    %c0_i32_0 = arith.constant 0 : i32
    %c0_i32_1 = arith.constant 0 : i32
    %c0_i32_2 = arith.constant 0 : i32
    return %c0_i32, %c0_i32_0, %c0_i32_1 : i32, i32, i32
  }
  func.func @transform_4(%arg0: i32) -> (i32, i32, i32) {
    %c0_i32 = arith.constant 0 : i32
    %c0_i32_0 = arith.constant 0 : i32
    %c0_i32_1 = arith.constant 0 : i32
    return %arg0, %c0_i32, %c0_i32_0 : i32, i32, i32
  }
}

</mosaic_0001>

<llo_original>
// kernel: tpu_custom_call.1
$region0: #{tpu_custom_call.1}
  #allocation0 [shape = 'u32[]', space=smem, size = 0x4, offset = 0x4, fixed_abs, tag = 'smem constant byte address 0x4 - core index']
  #allocation1 [shape = 'u32[144,128]{1,0:T(1,128)}', space=vmem, size = 0x12000, scoped, tag = 'internal scratch']
  %s0 = inlined_call_operand.hbm [shape: f32[2,8,32], index: 0, kind: input, shape index: {}]
  %s1 = inlined_call_operand.hbm [shape: f32[1,8,32], index: 1, kind: input, shape index: {}]
  %s2 = inlined_call_operand.hbm [shape: f32[1,1,32], index: 2, kind: input, shape index: {}]
  %s3 = inlined_call_operand.hbm [shape: f32[1,1,32], index: 3, kind: input, shape index: {}]
  %s4 = inlined_call_operand.hbm [shape: f32[2,8,32], index: 4, kind: output, shape index: {}]
  %s5 = sld [smem:[#allocation0]]
  $region42: #{tpu_custom_call.1} parent=0
    _
  %s7 = ssub.s32 1, %s5
  %s8 = scalar_select 0, %s7, %s5
  $region1: #{tpu_custom_call.1} parent=0
    #allocation2 [shape = 'u8[8192]{0}', space=vmem, size = 0x2000, scoped, tag = 'input window, operand 0, single buffered']
    #allocation3 [shape = 's32[1]{0}', space=sflag, size = 0x4, scoped, tag = 'scoped memory for tpu_custom_call.1']
    #allocation4 [shape = 's32[1]{0}', space=sflag, size = 0x4, scoped, tag = 'scoped memory for tpu_custom_call.1']
    #allocation5 [shape = 'u8[4096]{0}', space=vmem, size = 0x1000, scoped, tag = 'input window, operand 1, single buffered']
    #allocation6 [shape = 's32[1]{0}', space=sflag, size = 0x4, scoped, tag = 'scoped memory for tpu_custom_call.1']
    #allocation7 [shape = 'u8[512]{0}', space=vmem, size = 0x400, scoped, tag = 'input window, operand 2, single buffered']
    #allocation8 [shape = 'u8[512]{0}', space=vmem, size = 0x400, scoped, tag = 'input window, operand 3, single buffered']
    #allocation9 [shape = 's32[1]{0}', space=sflag, size = 0x4, scoped, tag = 'scoped memory for tpu_custom_call.1']
    #allocation10 [shape = 'u8[8192]{0}', space=vmem, size = 0x2000, scoped, tag = 'output window, operand 0, single buffered']
    %9 = vsyncpa [#allocation3], 0
    %10 = vsyncpa [#allocation6], 0
    %11 = vsyncpa [#allocation9], 0
    %12 = vsyncpa [#allocation4], 0
    // Predicated region
    $region2: #{tpu_custom_call.1} parent=1 // pred_check
      _
    $region3: #{tpu_custom_call.1} parent=1 // pred_check_branch
      %14 = sbr.rel (0) target = $region5
    $region4: #{tpu_custom_call.1} parent=1 // pred_region
      %s16 = ssub.s32 256, 256
      %17 = vsyncadd [#allocation3], %s16
      %s18 = sshll.u32 [#allocation2], 4
      %s19 = int_to_ptr.vmem [resolvable:$true] %s18
      %24 = dma.hbm_to_vmem [thread:$0]  %s0, 256, %s19, [#allocation3], 128, 128, 8
    $region5: #{tpu_custom_call.1} parent=1 // pred_fallthru
      _
    // Predicated region
    $region6: #{tpu_custom_call.1} parent=1 // pred_check
      _
    $region7: #{tpu_custom_call.1} parent=1 // pred_check_branch
      %26 = sbr.rel (0) target = $region9
    $region8: #{tpu_custom_call.1} parent=1 // pred_region
      %s28 = ssub.s32 128, 128
      %29 = vsyncadd [#allocation6], %s28
      %s31 = sshll.u32 [#allocation5], 4
      %s32 = int_to_ptr.vmem [resolvable:$true] %s31
      %34 = dma.hbm_to_vmem [thread:$0]  %s1, 128, %s32, [#allocation6]
    $region9: #{tpu_custom_call.1} parent=1 // pred_fallthru
      _
    // Predicated region
    $region10: #{tpu_custom_call.1} parent=1 // pred_check
      _
    $region11: #{tpu_custom_call.1} parent=1 // pred_check_branch
      %36 = sbr.rel (0) target = $region13
    $region12: #{tpu_custom_call.1} parent=1 // pred_region
      %s38 = ssub.s32 16, 16
      %39 = vsyncadd [#allocation6], %s38
      %s41 = sshll.u32 [#allocation7], 4
      %s42 = int_to_ptr.vmem [resolvable:$true] %s41
      %44 = dma.hbm_to_vmem [thread:$0]  %s2, 16, %s42, [#allocation6]
    $region13: #{tpu_custom_call.1} parent=1 // pred_fallthru
      _
    // Predicated region
    $region14: #{tpu_custom_call.1} parent=1 // pred_check
      _
    $region15: #{tpu_custom_call.1} parent=1 // pred_check_branch
      %46 = sbr.rel (0) target = $region17
    $region16: #{tpu_custom_call.1} parent=1 // pred_region
      %s48 = ssub.s32 16, 16
      %49 = vsyncadd [#allocation9], %s48
      %s51 = sshll.u32 [#allocation8], 4
      %s52 = int_to_ptr.vmem [resolvable:$true] %s51
      %54 = dma.hbm_to_vmem [thread:$0]  %s3, 16, %s52, [#allocation9]
    $region17: #{tpu_custom_call.1} parent=1 // pred_fallthru
      _
    // Predicated region
    $region18: #{tpu_custom_call.1} parent=1 // pred_check
      _
    $region19: #{tpu_custom_call.1} parent=1 // pred_check_branch
      %56 = sbr.rel (0) target = $region21
    $region20: #{tpu_custom_call.1} parent=1 // pred_region
      %57 = dma.done [#allocation3], 256
    $region21: #{tpu_custom_call.1} parent=1 // pred_fallthru
      _
    // Predicated region
    $region22: #{tpu_custom_call.1} parent=1 // pred_check
      _
    $region23: #{tpu_custom_call.1} parent=1 // pred_check_branch
      %59 = sbr.rel (0) target = $region25
    $region24: #{tpu_custom_call.1} parent=1 // pred_region
      %60 = dma.done [#allocation6], 128
    $region25: #{tpu_custom_call.1} parent=1 // pred_fallthru
      _
    // Predicated region
    $region26: #{tpu_custom_call.1} parent=1 // pred_check
      _
    $region27: #{tpu_custom_call.1} parent=1 // pred_check_branch
      %62 = sbr.rel (0) target = $region29
    $region28: #{tpu_custom_call.1} parent=1 // pred_region
      %63 = dma.done [#allocation6], 16
    $region29: #{tpu_custom_call.1} parent=1 // pred_fallthru
      _
    // Predicated region
    $region30: #{tpu_custom_call.1} parent=1 // pred_check
      _
    $region31: #{tpu_custom_call.1} parent=1 // pred_check_branch
      %65 = sbr.rel (0) target = $region33
    $region32: #{tpu_custom_call.1} parent=1 // pred_region
      %66 = dma.done [#allocation9], 16
    $region33: #{tpu_custom_call.1} parent=1 // pred_fallthru
      _
    %v67 = vld [vmem:[#allocation2] sm:$0xff]
    %v68 = vld [vmem:[#allocation2 + $0x8] sm:$0xff]
    %v69 = vld [vmem:[#allocation5] sm:$0xff]
    %v70 = vadd.f32 %v67, %v69
    %v71 = vadd.f32 %v68, %v69
    %vm72 = vcmask 261120
    %v73 = vsel %vm72, %v70, 0.0
    %74 = vadd.xlane.f32.xlu0 %v73
    %v75 = vpop.xlane.xlu0 %74
    %v76 = vsel %vm72, %v71, 0.0
    %77 = vadd.xlane.f32.xlu0 %v76
    %v78 = vpop.xlane.xlu0 %77
    %v79 = vmul.f32 %v75, 0.03125
    %v80 = vmul.f32 %v78, 0.03125
    %v81 = vsub.f32 %v70, %v79
    %v82 = vsub.f32 %v71, %v80
    %v83 = vmul.f32 %v81, %v81
    %v84 = vmul.f32 %v82, %v82
    %v85 = vsel %vm72, %v83, 0.0
    %86 = vadd.xlane.f32.xlu0 %v85
    %v87 = vpop.xlane.xlu0 %86
    %v88 = vsel %vm72, %v84, 0.0
    %89 = vadd.xlane.f32.xlu0 %v88
    %v90 = vpop.xlane.xlu0 %89
    %v91 = vmul.f32 %v87, 0.03125
    %v92 = vmul.f32 %v90, 0.03125
    %v93 = vadd.f32 %v91, 1e-12
    %v94 = vadd.f32 %v92, 1e-12
    %v95 = vrsqrt.pop %v93
    %v96 = vrsqrt.pop %v94
    %v97 = vld [vmem:[#allocation7] sm:$0x1]
    %v98 = vld [vmem:[#allocation8] sm:$0x1]
    %v99 = vmul.f32 %v81, %v95
    %v100 = vmul.f32 %v82, %v96
    %v102 = vlaneseq
    %v103 = vshrl.u32 %v102, 7
    %v104 = vsub.s32 0, %v103
    %v105 = vrot.slane %v97, %v104
    %v107 = vmul.f32 %v99, %v105
    %v108 = vmul.f32 %v100, %v105
    %v110 = vlaneseq
    %v111 = vshrl.u32 %v110, 7
    %v112 = vsub.s32 0, %v111
    %v113 = vrot.slane %v98, %v112
    %v115 = vadd.f32 %v107, %v113
    %v116 = vadd.f32 %v108, %v113
    %117 = vst.msk [vmem:[#allocation10] sm:$0xff] %vm72, %v115
    %118 = vst.msk [vmem:[#allocation10 + $0x8] sm:$0xff] %vm72, %v116
    // Predicated region
    $region34: #{tpu_custom_call.1} parent=1 // pred_check
      _
    $region35: #{tpu_custom_call.1} parent=1 // pred_check_branch
      %120 = sbr.rel (0) target = $region37
    $region36: #{tpu_custom_call.1} parent=1 // pred_region
      %s122 = ssub.s32 256, 256
      %123 = vsyncadd [#allocation4], %s122
      %s124 = sshll.u32 [#allocation10], 4
      %s125 = int_to_ptr.vmem [resolvable:$true] %s124
      %130 = dma.vmem_to_hbm [thread:$0]  %s125, 256, %s4, [#allocation4], 128, 128, 8
    $region37: #{tpu_custom_call.1} parent=1 // pred_fallthru
      _
    // Predicated region
    $region38: #{tpu_custom_call.1} parent=1 // pred_check
      _
    $region39: #{tpu_custom_call.1} parent=1 // pred_check_branch
      %132 = sbr.rel (0) target = $region41
    $region40: #{tpu_custom_call.1} parent=1 // pred_region
      %133 = dma.done [#allocation4], 256
    $region41: #{tpu_custom_call.1} parent=1 // pred_fallthru
      _
    %134 = vsyncpa [#allocation3], 1
    %135 = vsyncpa [#allocation6], 1
    %136 = vsyncpa [#allocation9], 1
    %137 = vsyncpa [#allocation4], 1

</llo_original>
